<compile_context>
chip_gen: v7x
topology: tpu7x:2x2x1
jax: 0.10.0
libtpu: 0.0.40
codegen_flags: <defaults>
</compile_context>

<pallas_src>
import jax
import jax.numpy as jnp
from jax import lax
from jax.experimental import pallas as pl
from jax.experimental.pallas import tpu as pltpu


def cls_attention_kernel(x_ref, w_ref, o_ref):
    # x_ref: (Bb, C, S) VMEM tile (native NCHW, spatial flattened on lanes)
    # w_ref: (K, C)
    # o_ref: (Bb, K, C)
    w = w_ref[...]                                   # (K, C)
    bb = x_ref.shape[0]                              # static, small (<= 8)

    for b in range(bb):                              # short static unroll
        x = x_ref[b]                                 # (C, S)

        # 1x1 conv == per-pixel matmul over channels, in (K, S) layout.
        logits = jnp.dot(w, x, preferred_element_type=jnp.float32)        # (K, S)

        # Numerically-stable softmax over the spatial (lane) axis.
        logits = logits - jnp.max(logits, axis=-1, keepdims=True)
        p = jnp.exp(logits)
        denom = jnp.sum(p, axis=-1, keepdims=True)                        # (K, 1)
        att = p * pl.reciprocal(denom, approx=True)                       # (K, S)

        # bmm(att (K,S), feats_t (S,C)) == contract the S axes directly
        # (trans_b-style matmul, no materialized transpose). Keep x in its
        # native dtype so bf16 inputs stay on the fast MXU path.
        out = lax.dot_general(
            att.astype(x.dtype), x,
            dimension_numbers=(((1,), (1,)), ((), ())),
            preferred_element_type=jnp.float32)                           # (K, C)

        o_ref[b] = out.astype(o_ref.dtype)


def _pick_block_b(B, C, S, itemsize):
    """Batches folded per grid step: big enough to amortize step overhead,
    small enough to stay well under scoped VMEM on every generation (v7x has
    only 64 MiB physical / 32 MiB default scoped per TC), and capped so the
    in-kernel unroll stays short. Keeps >=2 grid steps when B allows so both
    v7x TensorCores get work."""
    budget = 8 << 20                                  # per x block (x2 double-buffer)
    max_bb = max(1, budget // (C * S * itemsize))
    bb = int(min(B, max_bb, 8))
    if B >= 2:
        bb = min(bb, -(-B // 2))                      # cdiv(B, 2): >=2 grid steps
    while B % bb != 0:                                # full blocks only
        bb -= 1
    return bb


def cls_attention(feats_nchw, conv_weight):
    """feats_nchw: (B, C, H, W); conv_weight: (K, C, 1, 1). Returns (B, K, C)."""
    B, C, H, W = feats_nchw.shape
    K = conv_weight.shape[0]
    S = H * W

    # Native layout: no transpose (avoids a full HBM read+write of the feature map).
    x = feats_nchw.reshape(B, C, S)                   # (B, C, S)
    w = conv_weight.reshape(K, C)                     # (K, C)

    bb = _pick_block_b(B, C, S, x.dtype.itemsize)
    grid = (B // bb,)

    return pl.pallas_call(
        cls_attention_kernel,
        out_shape=jax.ShapeDtypeStruct((B, K, C), feats_nchw.dtype),
        grid_spec=pltpu.PrefetchScalarGridSpec(
            num_scalar_prefetch=0,
            grid=grid,
            in_specs=[
                pl.BlockSpec((bb, C, S), lambda b: (b, 0, 0)),
                pl.BlockSpec((K, C), lambda b: (0, 0)),
            ],
            out_specs=pl.BlockSpec((bb, K, C), lambda b: (b, 0, 0)),
        ),
        compiler_params=pltpu.CompilerParams(
            dimension_semantics=("parallel",)),
    )(x, w)


def cls_attention_ref(feats_nchw, conv_weight):
    """Pure-JAX reference mirroring the PyTorch forward."""
    B, C, H, W = feats_nchw.shape
    K = conv_weight.shape[0]
    w = conv_weight.reshape(K, C)
    att = jnp.einsum("kc,bchw->bkhw", w, feats_nchw).reshape(B, K, H * W)
    att = jax.nn.softmax(att, axis=2)
    feats_t = jnp.transpose(feats_nchw.reshape(B, C, H * W), (0, 2, 1))
    return jnp.einsum("bks,bsc->bkc", att, feats_t)


if __name__ == "__main__":
    B, feat_size, num_classes, H, W = 2, 32, 8, 16, 16

    key = jax.random.PRNGKey(0)
    k_x, k_w = jax.random.split(key)
    feats = jax.random.normal(k_x, (B, feat_size, H, W), dtype=jnp.float32)
    # deterministic synthetic conv weight (K, C, 1, 1), no bias (matches module)
    conv_w = (jax.random.normal(k_w, (num_classes, feat_size, 1, 1),
                                dtype=jnp.float32) * (1.0 / feat_size ** 0.5))

    out = cls_attention(feats, conv_w)
    out = jax.block_until_ready(out)

    ref = cls_attention_ref(feats, conv_w)
    assert out.shape == (B, num_classes, feat_size)
    # Tolerance slightly loosened vs 1e-4 because the softmax denominator uses
    # the EUP approximate reciprocal (pl.reciprocal(approx=True)).
    assert jnp.allclose(out, ref, atol=1e-3, rtol=1e-3)
    print("KERNEL_OK")
</pallas_src>

<mosaic_0001>
module attributes {stable_mosaic.version = 11 : i64} {
  func.func @cls_attention_kernel(%arg0: i32, %arg1: memref<1x32x256xf32, #tpu.memory_space<vmem>>, %arg2: memref<8x32xf32, #tpu.memory_space<vmem>>, %arg3: memref<1x8x32xf32, #tpu.memory_space<vmem>>) attributes {dimension_semantics = [#tpu.dimension_semantics<parallel>], iteration_bounds = array<i64: 2>, scalar_prefetch = 0 : i64, scratch_operands = 0 : i64, tpu.core_type = #tpu.core_type<tc>, window_params = [{transform_indices = @transform_0, window_bounds = array<i64: 1, 32, 256>}, {pipeline_mode = #tpu.pipeline_mode<synchronous>, transform_indices = @transform_1, window_bounds = array<i64: 8, 32>}, {transform_indices = @transform_2, window_bounds = array<i64: 1, 8, 32>}]} {
    %c0 = arith.constant 0 : index
    %c0_0 = arith.constant 0 : index
    %0 = vector.load %arg2[%c0, %c0_0] : memref<8x32xf32, #tpu.memory_space<vmem>>, vector<8x32xf32>
    %c0_1 = arith.constant 0 : index
    %c0_2 = arith.constant 0 : index
    %c0_3 = arith.constant 0 : index
    %1 = vector.load %arg1[%c0_1, %c0_2, %c0_3] : memref<1x32x256xf32, #tpu.memory_space<vmem>>, vector<1x32x256xf32>
    %2 = vector.shape_cast %1 : vector<1x32x256xf32> to vector<32x256xf32>
    %cst = arith.constant dense<0.000000e+00> : vector<8x256xf32>
    %3 = tpu.matmul %0, %2, %cst {dimension_numbers = #tpu.dot_dimension_numbers<[1], [0], [0], [1], [0, 0, 1, 1], [], []>} : vector<8x32xf32>, vector<32x256xf32>, vector<8x256xf32> -> vector<8x256xf32>
    %cst_4 = arith.constant dense<0xFF800000> : vector<8xf32>
    %4 = vector.multi_reduction <maximumf>, %3, %cst_4 [1] : vector<8x256xf32> to vector<8xf32>
    %5 = vector.shape_cast %4 : vector<8xf32> to vector<8x1xf32>
    %6 = vector.broadcast %5 : vector<8x1xf32> to vector<8x256xf32>
    %7 = arith.subf %3, %6 : vector<8x256xf32>
    %8 = math.exp %7 : vector<8x256xf32>
    %cst_5 = arith.constant dense<0.000000e+00> : vector<8xf32>
    %9 = vector.multi_reduction <add>, %8, %cst_5 [1] : vector<8x256xf32> to vector<8xf32>
    %10 = vector.shape_cast %9 : vector<8xf32> to vector<8x1xf32>
    %11 = tpu.reciprocal %10 {approx = true} : vector<8x1xf32> -> vector<8x1xf32>
    %12 = vector.broadcast %11 : vector<8x1xf32> to vector<8x256xf32>
    %13 = arith.mulf %8, %12 : vector<8x256xf32>
    %cst_6 = arith.constant dense<0.000000e+00> : vector<8x32xf32>
    %14 = tpu.matmul %13, %2, %cst_6 {dimension_numbers = #tpu.dot_dimension_numbers<[1], [1], [0], [0], [0, 0, 1, 0], [], []>} : vector<8x256xf32>, vector<32x256xf32>, vector<8x32xf32> -> vector<8x32xf32>
    %c0_7 = arith.constant 0 : index
    %c0_8 = arith.constant 0 : index
    %c0_9 = arith.constant 0 : index
    %15 = vector.load %arg3[%c0_7, %c0_8, %c0_9] : memref<1x8x32xf32, #tpu.memory_space<vmem>>, vector<1x8x32xf32>
    %16 = vector.shape_cast %15 : vector<1x8x32xf32> to vector<8x32xf32>
    %17 = vector.shape_cast %14 : vector<8x32xf32> to vector<1x8x32xf32>
    tpu.vector_store %arg3[%c0_7, %c0_8, %c0_9], %17 {strides = array<i32>} : memref<1x8x32xf32, #tpu.memory_space<vmem>>, vector<1x8x32xf32>,
    return
  }
  func.func @transform_0(%arg0: i32) -> (i32, i32, i32) {
    %c0_i32 = arith.constant 0 : i32
    %c0_i32_0 = arith.constant 0 : i32
    %c0_i32_1 = arith.constant 0 : i32
    return %arg0, %c0_i32, %c0_i32_0 : i32, i32, i32
  }
  func.func @transform_1(%arg0: i32) -> (i32, i32) {
    %c0_i32 = arith.constant 0 : i32
    %c0_i32_0 = arith.constant 0 : i32
    %c0_i32_1 = arith.constant 0 : i32
    return %c0_i32, %c0_i32_0 : i32, i32
  }
  func.func @transform_2(%arg0: i32) -> (i32, i32, i32) {
    %c0_i32 = arith.constant 0 : i32
    %c0_i32_0 = arith.constant 0 : i32
    %c0_i32_1 = arith.constant 0 : i32
    return %arg0, %c0_i32, %c0_i32_0 : i32, i32, i32
  }
}

</mosaic_0001>

<llo_original>
// kernel: tpu_custom_call.1
$region0: #{tpu_custom_call.1}
  #allocation0 [shape = 'u32[]', space=smem, size = 0x4, offset = 0x4, fixed_abs, tag = 'smem constant byte address 0x4 - core index']
  #allocation1 [shape = 'u32[144,128]{1,0:T(1,128)}', space=vmem, size = 0x12000, scoped, tag = 'internal scratch']
  %s0 = inlined_call_operand.hbm [shape: f32[2,32,256], index: 0, kind: input, shape index: {}]
  %s1 = inlined_call_operand.hbm [shape: f32[8,32], index: 1, kind: input, shape index: {}]
  %s2 = inlined_call_operand.hbm [shape: f32[2,8,32], index: 2, kind: output, shape index: {}]
  %s3 = sld [smem:[#allocation0]]
  $region49: #{tpu_custom_call.1} parent=0
    _
  %s5 = ssub.s32 1, %s3
  %s6 = scalar_select 0, %s5, %s3
  $region1: #{tpu_custom_call.1} parent=0
    #allocation2 [shape = 'u8[65536]{0}', space=vmem, size = 0x10000, scoped, tag = 'input window, operand 0']
    #allocation3 [shape = 's32[2]{0}', space=sflag, size = 0x8, scoped, tag = 'scoped memory for tpu_custom_call.1']
    #allocation4 [shape = 's32[2]{0}', space=sflag, size = 0x8, scoped, tag = 'scoped memory for tpu_custom_call.1']
    #allocation5 [shape = 'u8[4096]{0}', space=vmem, size = 0x1000, scoped, tag = 'input window, operand 1, single buffered']
    #allocation6 [shape = 's32[1]{0}', space=sflag, size = 0x4, scoped, tag = 'scoped memory for tpu_custom_call.1']
    #allocation7 [shape = 'u8[8192]{0}', space=vmem, size = 0x2000, scoped, tag = 'output window, operand 0']
    %7 = vsyncpa [#allocation3], 0
    %s8 = scalar_lea.sflag [#allocation3], 1
    %9 = vsyncpa %s8, 0
    %10 = vsyncpa [#allocation6], 0
    %11 = vsyncpa [#allocation4], 0
    %s12 = scalar_lea.sflag [#allocation4], 1
    %13 = vsyncpa %s12, 0
    loop: start=0, step=1, limit=4
    $region2: #{tpu_custom_call.1} parent=1 // loop_pre_header
      _
    $region3: #{tpu_custom_call.1} parent=1 // loop_header
      %s15 = sphi 0, %s19
      %p16 = scmp.ge.s32.totalorder %s15, 4
      %s25 = sphi 0, %s27
      %s28 = sphi 0, %s25
      %s29 = sphi 0, %s28
      %s45 = sphi 0, %s29
      %s49 = sphi 0, %s49
      %s51 = sphi 0, %s49
      %s52 = sphi 0, %s51
      %s66 = sphi 0, %s52
      %s72 = sphi 0, %s74
      %s75 = sphi 0, %s72
      %s76 = sphi 0, %s75
      %s92 = sphi 0, %s76
    $region4: #{tpu_custom_call.1} parent=1 // loop_header_branch
      %18 = sbr.rel (%p16) target = $region8
    $region5: #{tpu_custom_call.1} parent=1 // loop_body
      %s20 = ssub.s32 %s15, 1
      %s21 = ssub.s32 %s15, 2
      %s22 = sadd.s32 %s15, 1
      %s23 = ssub.s32 %s15, %s22
      %p24 = scmp.eq.s32.totalorder %s23, 0
      %s26 = sadd.s32 %s25, 1
      %s27 = scalar_select %p24, %s25, %s26
      %p30 = pneg %p24
      %p31 = scmp.eq.s32.totalorder %s15, 1
      %p32 = por %p30, %p31
      %p33 = scmp.ne.s32.totalorder %s25, %s28
      %p34 = scmp.eq.s32.totalorder %s15, 0
      %p35 = por %p33, %p34
      %p36 = scmp.ne.s32.totalorder %s25, %s28
      %p37 = scmp.eq.s32.totalorder %s20, 1
      %p38 = por %p36, %p37
      %p39 = scmp.ne.s32.totalorder %s28, %s29
      %p40 = scmp.eq.s32.totalorder %s20, 0
      %p41 = por %p39, %p40
      %p42 = scmp.ne.s32.totalorder %s28, %s29
      %p43 = scmp.eq.s32.totalorder %s21, 1
      %p44 = por %p42, %p43
      %p46 = scmp.ne.s32.totalorder %s29, %s45
      %p47 = scmp.eq.s32.totalorder %s21, 0
      %p48 = por %p46, %p47
      %s50 = sadd.s32 %s49, 1
      %p53 = scmp.eq.s32.totalorder %s15, 1
      %p54 = scmp.ne.s32.totalorder %s49, %s51
      %p55 = scmp.eq.s32.totalorder %s15, 0
      %p56 = por %p54, %p55
      %p57 = scmp.ne.s32.totalorder %s49, %s51
      %p58 = scmp.eq.s32.totalorder %s20, 1
      %p59 = por %p57, %p58
      %p60 = scmp.ne.s32.totalorder %s51, %s52
      %p61 = scmp.eq.s32.totalorder %s20, 0
      %p62 = por %p60, %p61
      %p63 = scmp.ne.s32.totalorder %s51, %s52
      %p64 = scmp.eq.s32.totalorder %s21, 1
      %p65 = por %p63, %p64
      %p67 = scmp.ne.s32.totalorder %s52, %s66
      %p68 = scmp.eq.s32.totalorder %s21, 0
      %p69 = por %p67, %p68
      %s70 = ssub.s32 %s15, %s22
      %p71 = scmp.eq.s32.totalorder %s70, 0
      %s73 = sadd.s32 %s72, 1
      %s74 = scalar_select %p71, %s72, %s73
      %p77 = pneg %p71
      %p78 = scmp.eq.s32.totalorder %s15, 1
      %p79 = por %p77, %p78
      %p80 = scmp.ne.s32.totalorder %s72, %s75
      %p81 = scmp.eq.s32.totalorder %s15, 0
      %p82 = por %p80, %p81
      %p83 = scmp.ne.s32.totalorder %s72, %s75
      %p84 = scmp.eq.s32.totalorder %s20, 1
      %p85 = por %p83, %p84
      %p86 = scmp.ne.s32.totalorder %s75, %s76
      %p87 = scmp.eq.s32.totalorder %s20, 0
      %p88 = por %p86, %p87
      %p89 = scmp.ne.s32.totalorder %s75, %s76
      %p90 = scmp.eq.s32.totalorder %s21, 1
      %p91 = por %p89, %p90
      %p93 = scmp.ne.s32.totalorder %s76, %s92
      %p94 = scmp.eq.s32.totalorder %s21, 0
      %p95 = por %p93, %p94
      %p96 = scmp.le.s32.totalorder 1, %s15
      %p97 = scmp.lt.s32.totalorder %s15, 3
      %p98 = pnand %p96, %p97
      %p99 = pneg %p98
      // Predicated region
      $region9: #{tpu_custom_call.1} parent=5 // pred_check
        _
      $region10: #{tpu_custom_call.1} parent=5 // pred_check_branch
        %101 = sbr.rel (%p98) target = $region12
      $region11: #{tpu_custom_call.1} parent=5 // pred_region
        %s102 = ssub.s32 %s15, 1
        // Predicated region
        $region13: #{tpu_custom_call.1} parent=11 // pred_check
          %p103 = pneg %p62
        $region14: #{tpu_custom_call.1} parent=11 // pred_check_branch
          %105 = sbr.rel (%p103) target = $region16
        $region15: #{tpu_custom_call.1} parent=11 // pred_region
          %s107 = ssub.s32 128, 128
          %108 = vsyncadd [#allocation6], %s107
          %s110 = sshll.u32 [#allocation5], 4
          %s111 = int_to_ptr.vmem [resolvable:$true] %s110
          %113 = dma.hbm_to_vmem [thread:$0]  %s1, 128, %s111, [#allocation6]
        $region16: #{tpu_custom_call.1} parent=11 // pred_fallthru
          _
      $region12: #{tpu_custom_call.1} parent=5 // pred_fallthru
        _
      %p114 = scmp.lt.s32.totalorder %s15, 2
      // Predicated region
      $region17: #{tpu_custom_call.1} parent=5 // pred_check
        %p115 = pneg %p114
      $region18: #{tpu_custom_call.1} parent=5 // pred_check_branch
        %117 = sbr.rel (%p115) target = $region20
      $region19: #{tpu_custom_call.1} parent=5 // pred_region
        // Predicated region
        $region21: #{tpu_custom_call.1} parent=19 // pred_check
          %p118 = pneg %p35
        $region22: #{tpu_custom_call.1} parent=19 // pred_check_branch
          %120 = sbr.rel (%p118) target = $region24
        $region23: #{tpu_custom_call.1} parent=19 // pred_region
          %s121 = sand.u32 %s25, 1
          %s122 = scalar_lea.sflag [#allocation3], %s121
          %s123 = sand.u32 %s25, 1
          %s124 = smul.addr %s123, 64
          %s125 = scalar_lea.vmem [#allocation2], %s124
          %s127 = ssub.s32 1024, 1024
          %128 = vsyncadd %s122, %s127
          %s129 = smul.addr %s15, 8
          %s130 = smul.addr %s129, 128
          %s131 = scalar_lea.hbm %s0, %s130
          %s132 = sshll.u32 %s125, 4
          %s133 = int_to_ptr.vmem [resolvable:$true] %s132
          %138 = dma.hbm_to_vmem [thread:$0]  %s131, 1024, %s133, %s122, 256, 256, 16
        $region24: #{tpu_custom_call.1} parent=19 // pred_fallthru
          _
      $region20: #{tpu_custom_call.1} parent=5 // pred_fallthru
        _
      %p139 = scmp.le.s32.totalorder 1, %s15
      %p140 = scmp.lt.s32.totalorder %s15, 3
      %p141 = pnand %p139, %p140
      %p142 = pneg %p141
      // Predicated region
      $region25: #{tpu_custom_call.1} parent=5 // pred_check
        _
      $region26: #{tpu_custom_call.1} parent=5 // pred_check_branch
        %144 = sbr.rel (%p141) target = $region28
      $region27: #{tpu_custom_call.1} parent=5 // pred_region
        %s145 = ssub.s32 %s15, 1
        %s146 = sand.u32 %s28, 1
        %s147 = scalar_lea.sflag [#allocation3], %s146
        %s148 = sand.u32 %s28, 1
        %s149 = smul.addr %s148, 64
        %s150 = scalar_lea.vmem [#allocation2], %s149
        // Predicated region
        $region29: #{tpu_custom_call.1} parent=27 // pred_check
          %p151 = pneg %p41
        $region30: #{tpu_custom_call.1} parent=27 // pred_check_branch
          %153 = sbr.rel (%p151) target = $region32
        $region31: #{tpu_custom_call.1} parent=27 // pred_region
          %154 = dma.done %s147, 1024
        $region32: #{tpu_custom_call.1} parent=27 // pred_fallthru
          _
        // Predicated region
        $region33: #{tpu_custom_call.1} parent=27 // pred_check
          %p155 = pneg %p62
        $region34: #{tpu_custom_call.1} parent=27 // pred_check_branch
          %157 = sbr.rel (%p155) target = $region36
        $region35: #{tpu_custom_call.1} parent=27 // pred_region
          %158 = dma.done [#allocation6], 128
        $region36: #{tpu_custom_call.1} parent=27 // pred_fallthru
          _
        %s159 = sand.u32 %s28, 1
        %s160 = scalar_lea.sflag [#allocation3], %s159
        %s161 = sand.u32 %s28, 1
        %s162 = smul.addr %s161, 64
        %s163 = scalar_lea.vmem [#allocation2], %s162
        %p164 = pneg %p41
        %p165 = pneg %p38
        %p166 = pneg %p62
        %p167 = pneg %p59
        %p168 = pneg %p88
        %p169 = pneg %p85
        %s170 = sand.u32 %s75, 1
        %s171 = scalar_lea.sflag [#allocation4], %s170
        %s172 = sand.u32 %s75, 1
        %s173 = smul.addr %s172, 8
        %s174 = scalar_lea.vmem [#allocation7], %s173
        %v175 = vld [vmem:[#allocation5] sm:$0xff]
        %v176 = vld [vmem:[%s150] sm:$0xff]
        %v177 = vld [vmem:[%s150 + $0x8] sm:$0xff]
        %v178 = vld [vmem:[%s150 + $0x10] sm:$0xff]
        %v179 = vld [vmem:[%s150 + $0x18] sm:$0xff]
        %v180 = vld [vmem:[%s150 + $0x20] sm:$0xff]
        %v181 = vld [vmem:[%s150 + $0x28] sm:$0xff]
        %v182 = vld [vmem:[%s150 + $0x30] sm:$0xff]
        %v183 = vld [vmem:[%s150 + $0x38] sm:$0xff]
        %vm184 = vcmask 261120
        %v186 = vsel %vm184, %v175, 0
        %188 = vmatprep.subr.mxu0 %v177
        %189 = vmatpush1.msra.mxu0 %v176
        %190 = vmatprep.subr.mxu0 %v179
        %191 = vmatpush1.msra.mxu0 %v178
        %192 = vmatprep.subr.mxu0 %v181
        %193 = vmatpush1.msra.mxu0 %v180
        %194 = vmatprep.subr.mxu0 %v183
        %195 = vmatpush1.msra.mxu0 %v182
        %196 = vmatprep.subr.mxu0 0.0
        %197 = vmatpush1.msra.mxu0 0.0
        %198 = vmatprep.subr.mxu0 0.0
        %199 = vmatpush1.msra.mxu0 0.0
        %200 = vmatprep.subr.mxu0 0.0
        %201 = vmatpush1.msra.mxu0 0.0
        %202 = vmatprep.subr.mxu0 0.0
        %203 = vmatpush1.msra.mxu0 0.0
        %204 = vmatprep.subr.mxu0 0.0
        %205 = vmatpush1.msra.mxu0 0.0
        %206 = vmatprep.subr.mxu0 0.0
        %207 = vmatpush1.msra.mxu0 0.0
        %208 = vmatprep.subr.mxu0 0.0
        %209 = vmatpush1.msra.mxu0 0.0
        %210 = vmatprep.subr.mxu0 0.0
        %211 = vmatpush1.msra.mxu0 0.0
        %212 = vmatprep.subr.mxu0 0.0
        %213 = vmatpush1.msra.mxu0 0.0
        %214 = vmatprep.subr.mxu0 0.0
        %215 = vmatpush1.msra.mxu0 0.0
        %216 = vmatprep.subr.mxu0 0.0
        %217 = vmatpush1.msra.mxu0 0.0
        %218 = vmatprep.subr.mxu0 0.0
        %219 = vmatpush1.msra.mxu0 0.0
        %220 = vmatprep.subr.mxu0 0.0
        %221 = vmatpush1.msra.mxu0 0.0
        %222 = vmatprep.subr.mxu0 0.0
        %223 = vmatpush1.msra.mxu0 0.0
        %224 = vmatprep.subr.mxu0 0.0
        %225 = vmatpush1.msra.mxu0 0.0
        %226 = vmatprep.subr.mxu0 0.0
        %227 = vmatpush1.msra.mxu0 0.0
        %228 = vmatprep.subr.mxu0 0.0
        %229 = vmatpush1.msra.mxu0 0.0
        %230 = vmatprep.subr.mxu0 0.0
        %231 = vmatpush1.msra.mxu0 0.0
        %232 = vmatprep.subr.mxu0 0.0
        %233 = vmatpush1.msra.mxu0 0.0
        %234 = vmatprep.subr.mxu0 0.0
        %235 = vmatpush1.msra.mxu0 0.0
        %236 = vmatprep.subr.mxu0 0.0
        %237 = vmatpush1.msra.mxu0 0.0
        %238 = vmatprep.subr.mxu0 0.0
        %239 = vmatpush1.msra.mxu0 0.0
        %240 = vmatprep.subr.mxu0 0.0
        %241 = vmatpush1.msra.mxu0 0.0
        %242 = vmatprep.subr.mxu0 0.0
        %243 = vmatpush1.msra.mxu0 0.0
        %244 = vmatprep.subr.mxu0 0.0
        %245 = vmatpush1.msra.mxu0 0.0
        %246 = vmatprep.subr.mxu0 0.0
        %247 = vmatpush1.msra.mxu0 0.0
        %248 = vmatprep.subr.mxu0 0.0
        %249 = vmatpush1.msra.mxu0 0.0
        %250 = vmatprep.subr.mxu0 0.0
        %251 = vmatpush1.msra.mxu0 0.0
        %252 = vmatprep.mubr.f32.mxu0 0.0
        %253 = vmatmul.mubr.f32.gmra.mrb[0].mxu0 %v186
        %v254 = vpop.f32.mrb[0].mxu0
        %v255 = vadd.f32 0.0, %v254
        %v256 = vpop.f32.mrb[0].mxu0
        %v257 = vadd.f32 0.0, %v256
        %258 = vdwg.mxu0
        %v259 = vmax.f32 %v255, %v257
        %260 = vmax.xlane.f32.xlu0 %v259
        %v261 = vpop.xlane.xlu0 %260
        %v262 = vsub.f32 %v255, %v261
        %v263 = vsub.f32 %v257, %v261
        %v264 = vmul.f32 %v262, 1.442695
        %v265 = vpow.pop %v264
        %v266 = vmul.f32 %v263, 1.442695
        %v267 = vpow.pop %v266
        %v268 = vadd.f32 %v265, %v267
        %269 = vadd.xlane.f32.xlu0 %v268
        %v270 = vpop.xlane.xlu0 %269
        %v271 = vrcp.pop %v270
        %v272 = vmul.f32 %v265, %v271
        %v273 = vmul.f32 %v267, %v271
        %274 = vmatprep.subr.mxu0 %v177
        %275 = vmatpush1.xpose.msra.mxu0 %v176
        %276 = vmatprep.subr.mxu0 %v179
        %277 = vmatpush1.xpose.msra.mxu0 %v178
        %278 = vmatprep.subr.mxu0 %v181
        %279 = vmatpush1.xpose.msra.mxu0 %v180
        %280 = vmatprep.subr.mxu0 %v183
        %281 = vmatpush1.xpose.msra.mxu0 %v182
        %282 = vmatprep.subr.mxu0 0.0
        %283 = vmatpush1.xpose.msra.mxu0 0.0
        %284 = vmatprep.subr.mxu0 0.0
        %285 = vmatpush1.xpose.msra.mxu0 0.0
        %286 = vmatprep.subr.mxu0 0.0
        %287 = vmatpush1.xpose.msra.mxu0 0.0
        %288 = vmatprep.subr.mxu0 0.0
        %289 = vmatpush1.xpose.msra.mxu0 0.0
        %290 = vmatprep.subr.mxu0 0.0
        %291 = vmatpush1.xpose.msra.mxu0 0.0
        %292 = vmatprep.subr.mxu0 0.0
        %293 = vmatpush1.xpose.msra.mxu0 0.0
        %294 = vmatprep.subr.mxu0 0.0
        %295 = vmatpush1.xpose.msra.mxu0 0.0
        %296 = vmatprep.subr.mxu0 0.0
        %297 = vmatpush1.xpose.msra.mxu0 0.0
        %298 = vmatprep.subr.mxu0 0.0
        %299 = vmatpush1.xpose.msra.mxu0 0.0
        %300 = vmatprep.subr.mxu0 0.0
        %301 = vmatpush1.xpose.msra.mxu0 0.0
        %302 = vmatprep.subr.mxu0 0.0
        %303 = vmatpush1.xpose.msra.mxu0 0.0
        %304 = vmatprep.subr.mxu0 0.0
        %305 = vmatpush1.xpose.msra.mxu0 0.0
        %306 = vmatprep.subr.mxu0 0.0
        %307 = vmatpush1.xpose.msra.mxu0 0.0
        %308 = vmatprep.subr.mxu0 0.0
        %309 = vmatpush1.xpose.msra.mxu0 0.0
        %310 = vmatprep.subr.mxu0 0.0
        %311 = vmatpush1.xpose.msra.mxu0 0.0
        %312 = vmatprep.subr.mxu0 0.0
        %313 = vmatpush1.xpose.msra.mxu0 0.0
        %314 = vmatprep.subr.mxu0 0.0
        %315 = vmatpush1.xpose.msra.mxu0 0.0
        %316 = vmatprep.subr.mxu0 0.0
        %317 = vmatpush1.xpose.msra.mxu0 0.0
        %318 = vmatprep.subr.mxu0 0.0
        %319 = vmatpush1.xpose.msra.mxu0 0.0
        %320 = vmatprep.subr.mxu0 0.0
        %321 = vmatpush1.xpose.msra.mxu0 0.0
        %322 = vmatprep.subr.mxu0 0.0
        %323 = vmatpush1.xpose.msra.mxu0 0.0
        %324 = vmatprep.subr.mxu0 0.0
        %325 = vmatpush1.xpose.msra.mxu0 0.0
        %326 = vmatprep.subr.mxu0 0.0
        %327 = vmatpush1.xpose.msra.mxu0 0.0
        %328 = vmatprep.subr.mxu0 0.0
        %329 = vmatpush1.xpose.msra.mxu0 0.0
        %330 = vmatprep.subr.mxu0 0.0
        %331 = vmatpush1.xpose.msra.mxu0 0.0
        %332 = vmatprep.subr.mxu0 0.0
        %333 = vmatpush1.xpose.msra.mxu0 0.0
        %334 = vmatprep.subr.mxu0 0.0
        %335 = vmatpush1.xpose.msra.mxu0 0.0
        %336 = vmatprep.subr.mxu0 0.0
        %337 = vmatpush1.xpose.msra.mxu0 0.0
        %338 = vmatprep.mubr.f32.mxu0 %v273
        %339 = vmatmul.mubr.f32.gmra.mrb[0].mxu0 %v272
        %v340 = vpop.f32.mrb[0].mxu0
        %v341 = vadd.f32 0.0, %v340
        %v342 = vpop.f32.mrb[0].mxu0
        %343 = vdwg.mxu0
        %344 = vst.msk [vmem:[%s174] sm:$0xff] %vm184, %v341
        %s345 = sand.u32 %s75, 1
        %s346 = scalar_lea.sflag [#allocation4], %s345
        %s347 = sand.u32 %s75, 1
        %s348 = smul.addr %s347, 8
        %s349 = scalar_lea.vmem [#allocation7], %s348
        // Predicated region
        $region37: #{tpu_custom_call.1} parent=27 // pred_check
          %p350 = pneg %p85
        $region38: #{tpu_custom_call.1} parent=27 // pred_check_branch
          %352 = sbr.rel (%p350) target = $region40
        $region39: #{tpu_custom_call.1} parent=27 // pred_region
          %s354 = ssub.s32 128, 128
          %355 = vsyncadd %s346, %s354
          %s356 = smul.addr %s20, 128
          %s357 = scalar_lea.hbm %s2, %s356
          %s359 = sshll.u32 %s349, 4
          %s360 = int_to_ptr.vmem [resolvable:$true] %s359
          %362 = dma.vmem_to_hbm [thread:$0]  %s360, 128, %s357, %s346
        $region40: #{tpu_custom_call.1} parent=27 // pred_fallthru
          _
      $region28: #{tpu_custom_call.1} parent=5 // pred_fallthru
        _
      %p363 = scmp.le.s32.totalorder 2, %s15
      // Predicated region
      $region41: #{tpu_custom_call.1} parent=5 // pred_check
        %p364 = pneg %p363
      $region42: #{tpu_custom_call.1} parent=5 // pred_check_branch
        %366 = sbr.rel (%p364) target = $region44
      $region43: #{tpu_custom_call.1} parent=5 // pred_region
        %s367 = ssub.s32 %s15, 2
        // Predicated region
        $region45: #{tpu_custom_call.1} parent=43 // pred_check
          %p368 = pneg %p91
        $region46: #{tpu_custom_call.1} parent=43 // pred_check_branch
          %370 = sbr.rel (%p368) target = $region48
        $region47: #{tpu_custom_call.1} parent=43 // pred_region
          %s371 = sand.u32 %s76, 1
          %s372 = scalar_lea.sflag [#allocation4], %s371
          %s373 = sand.u32 %s76, 1
          %s374 = smul.addr %s373, 8
          %s375 = scalar_lea.vmem [#allocation7], %s374
          %376 = dma.done %s372, 128
        $region48: #{tpu_custom_call.1} parent=43 // pred_fallthru
          _
      $region44: #{tpu_custom_call.1} parent=5 // pred_fallthru
        _
    $region6: #{tpu_custom_call.1} parent=1 // loop_footer
      %s19 = sadd.s32 1, %s15
    $region7: #{tpu_custom_call.1} parent=1 // loop_footer_branch
      %14 = sbr.rel target = $region3
    $region8: #{tpu_custom_call.1} parent=1 // loop_exit
      _
    %377 = vsyncpa [#allocation3], 1
    %s378 = scalar_lea.sflag [#allocation3], 1
    %379 = vsyncpa %s378, 1
    %380 = vsyncpa [#allocation6], 1
    %381 = vsyncpa [#allocation4], 1
    %s382 = scalar_lea.sflag [#allocation4], 1
    %383 = vsyncpa %s382, 1

</llo_original>
